<compile_context>
chip_gen: v7x
topology: tpu7x:2x2x1
jax: 0.10.0
libtpu: 0.0.40
codegen_flags: <defaults>
</compile_context>

<pallas_src>
import jax
import jax.numpy as jnp
from jax.experimental import pallas as pl
from jax.experimental.pallas import tpu as pltpu


def _exp_kernel(x_ref, o_ref):
    # Elementwise exp on the whole VMEM tile (EUP transcendental path).
    o_ref[...] = jnp.exp(x_ref[...])


def _pick_row_tile(rows: int, sub: int, w: int, itemsize: int,
                   target_block_bytes: int) -> int:
    """Row tile: a multiple of `sub`, ~target_block_bytes per block, and at
    least 4 grid steps (preferring an even count) when there is enough work."""
    if rows <= sub:
        return rows
    # Largest tile that respects the byte budget (at least one sublane group).
    tr = max(sub, (target_block_bytes // (w * itemsize)) // sub * sub)
    tr = min(tr, max(sub, rows // sub * sub))
    # v7x megacore: want >= 4 grid steps (2 per TensorCore) so each core still
    # has double-buffered overlap; harmless on single-TC v5e/v6e.
    if rows >= 4 * sub:
        tr = min(tr, max(sub, (rows // 4) // sub * sub))
    # Best effort: an even step count avoids a 1-step load imbalance between
    # the two v7x TensorCores.
    steps = pl.cdiv(rows, tr)
    if steps > 1 and steps % 2 == 1:
        cand = max(sub, pl.cdiv(pl.cdiv(rows, steps + 1), sub) * sub)
        if pl.cdiv(rows, cand) % 2 == 0:
            tr = cand
    return tr


def exponential_forward(
    x: jax.Array,
    *,
    target_block_bytes: int = 4 * 1024 * 1024,
    small_bytes_cutoff: int = 1 * 1024 * 1024,
) -> jax.Array:
    """Elementwise exp matching torch.exp(x): same shape, same dtype."""
    orig_shape = x.shape
    dtype = x.dtype
    n = x.size
    if n == 0:
        return x

    itemsize = jnp.dtype(dtype).itemsize

    # Lane-dense width: widest power-of-two multiple of 128 that divides numel,
    # so the 2-D view is a pure bitcast (no padding / copy).
    w = None
    for cand in (2048, 1024, 512, 256, 128):
        if n % cand == 0:
            w = cand
            break

    # Fast path 1: tiny inputs -- a one-block pallas_call gets no pipelining
    # benefit and pays dispatch + prologue/epilogue DMA serialization.
    # Fast path 2: ragged numel -- any pad/slice/concat to make it tileable
    # costs >= 1 extra full HBM round trip, while XLA's fused exp is already
    # at the 2N-byte roofline minimum for this purely memory-bound op.
    if n * itemsize < small_bytes_cutoff or w is None:
        return jnp.exp(x)

    # Sublane multiple: 8 for 32-bit, 16 for bf16/fp16, 32 for 8-bit dtypes.
    sub = max(8, 32 // itemsize)

    rows = n // w
    x2 = x.reshape(rows, w)

    tr = _pick_row_tile(rows, sub, w, itemsize, target_block_bytes)
    grid = (pl.cdiv(rows, tr),)
    # When rows % tr != 0 the final block is a masked edge block: the stale
    # part of the VMEM buffer feeds exp() (possibly inf) but those rows are
    # never stored, so the result is unaffected.

    # Advisory cost hint so XLA schedules this memory-bound call correctly.
    cost = pl.CostEstimate(
        flops=0,
        transcendentals=n,
        bytes_accessed=2 * n * itemsize,
    )

    out2 = pl.pallas_call(
        _exp_kernel,
        out_shape=jax.ShapeDtypeStruct((rows, w), dtype),
        grid_spec=pltpu.PrefetchScalarGridSpec(
            num_scalar_prefetch=0,
            grid=grid,
            in_specs=[pl.BlockSpec((tr, w), lambda i: (i, 0))],
            out_specs=pl.BlockSpec((tr, w), lambda i: (i, 0)),
        ),
        compiler_params=pltpu.CompilerParams(
            dimension_semantics=("parallel",),
            # ~4 MiB blocks, double-buffered in + out => ~16 MiB footprint.
            # Raise the scoped-VMEM limit past v5e's 16 MiB default while
            # staying well under v7x's 64 MiB physical VMEM.
            vmem_limit_bytes=48 * 1024 * 1024,
        ),
        cost_estimate=cost,
    )(x2)

    return out2.reshape(orig_shape)


if __name__ == "__main__":
    key = jax.random.PRNGKey(0)
    k1, k2, k3 = jax.random.split(key, 3)

    # Small NCHW-like input consistent with typical module usage
    # (short-circuits to the fused-XLA fast path, same semantics).
    x_small = jax.random.normal(k1, (2, 4, 16, 16), dtype=jnp.float32)
    y_small = jax.block_until_ready(exponential_forward(x_small))
    assert y_small.shape == x_small.shape and y_small.dtype == x_small.dtype
    assert jnp.allclose(y_small, jnp.exp(x_small), rtol=1e-6, atol=1e-6)

    # Activation-sized input that exercises the Pallas kernel path
    # (2 MiB -> lane-dense (256, 2048) view, 4 parallel grid steps).
    x_big = jax.random.normal(k2, (16, 8, 32, 128), dtype=jnp.float32)
    y_big = jax.block_until_ready(exponential_forward(x_big))
    assert y_big.shape == x_big.shape and y_big.dtype == x_big.dtype
    assert jnp.allclose(y_big, jnp.exp(x_big), rtol=1e-6, atol=1e-6)

    # Ragged total size (numel not a multiple of 128) uses the roofline-optimal
    # jnp.exp fallback instead of the old pad + slice round trips.
    x_rag = jax.random.normal(k3, (3, 5, 7), dtype=jnp.float32)
    y_rag = jax.block_until_ready(exponential_forward(x_rag))
    assert y_rag.shape == x_rag.shape and y_rag.dtype == x_rag.dtype
    assert jnp.allclose(y_rag, jnp.exp(x_rag), rtol=1e-6, atol=1e-6)

    print("KERNEL_OK")
</pallas_src>

<mosaic_0001>
module attributes {stable_mosaic.version = 11 : i64} {
  func.func @_exp_kernel(%arg0: i32, %arg1: memref<64x2048xf32, #tpu.memory_space<vmem>>, %arg2: memref<64x2048xf32, #tpu.memory_space<vmem>>) attributes {dimension_semantics = [#tpu.dimension_semantics<parallel>], iteration_bounds = array<i64: 4>, scalar_prefetch = 0 : i64, scratch_operands = 0 : i64, tpu.core_type = #tpu.core_type<tc>, window_params = [{transform_indices = @transform_0, window_bounds = array<i64: 64, 2048>}, {transform_indices = @transform_1, window_bounds = array<i64: 64, 2048>}]} {
    %c0 = arith.constant 0 : index
    %c0_0 = arith.constant 0 : index
    %0 = vector.load %arg1[%c0, %c0_0] : memref<64x2048xf32, #tpu.memory_space<vmem>>, vector<64x2048xf32>
    %1 = math.exp %0 : vector<64x2048xf32>
    %c0_1 = arith.constant 0 : index
    %c0_2 = arith.constant 0 : index
    %2 = vector.load %arg2[%c0_1, %c0_2] : memref<64x2048xf32, #tpu.memory_space<vmem>>, vector<64x2048xf32>
    tpu.vector_store %arg2[%c0_1, %c0_2], %1 {strides = array<i32>} : memref<64x2048xf32, #tpu.memory_space<vmem>>, vector<64x2048xf32>,
    return
  }
  func.func @transform_0(%arg0: i32) -> (i32, i32) {
    %c0_i32 = arith.constant 0 : i32
    %c0_i32_0 = arith.constant 0 : i32
    return %arg0, %c0_i32 : i32, i32
  }
  func.func @transform_1(%arg0: i32) -> (i32, i32) {
    %c0_i32 = arith.constant 0 : i32
    %c0_i32_0 = arith.constant 0 : i32
    return %arg0, %c0_i32 : i32, i32
  }
}

</mosaic_0001>

<llo_original>
// kernel: tpu_custom_call.1
$region0: #{tpu_custom_call.1}
  #allocation0 [shape = 'u32[]', space=smem, size = 0x4, offset = 0x4, fixed_abs, tag = 'smem constant byte address 0x4 - core index']
  #allocation1 [shape = 'u32[144,128]{1,0:T(1,128)}', space=vmem, size = 0x12000, scoped, tag = 'internal scratch']
  %s0 = inlined_call_operand.hbm [shape: f32[256,2048], index: 0, kind: input, shape index: {}]
  %s1 = inlined_call_operand.hbm [shape: f32[256,2048], index: 1, kind: output, shape index: {}]
  %s2 = sld [smem:[#allocation0]]
  $region41: #{tpu_custom_call.1} parent=0
    _
  %s4 = ssub.s32 1, %s2
  %s5 = scalar_select 0, %s4, %s2
  $region1: #{tpu_custom_call.1} parent=0
    #allocation2 [shape = 'u8[1048576]{0}', space=vmem, size = 0x100000, scoped, tag = 'input window, operand 0']
    #allocation3 [shape = 's32[2]{0}', space=sflag, size = 0x8, scoped, tag = 'scoped memory for tpu_custom_call.1']
    #allocation4 [shape = 's32[2]{0}', space=sflag, size = 0x8, scoped, tag = 'scoped memory for tpu_custom_call.1']
    #allocation5 [shape = 'u8[1048576]{0}', space=vmem, size = 0x100000, scoped, tag = 'output window, operand 0']
    %6 = vsyncpa [#allocation3], 0
    %s7 = scalar_lea.sflag [#allocation3], 1
    %8 = vsyncpa %s7, 0
    %9 = vsyncpa [#allocation4], 0
    %s10 = scalar_lea.sflag [#allocation4], 1
    %11 = vsyncpa %s10, 0
    loop: start=0, step=1, limit=6
    $region2: #{tpu_custom_call.1} parent=1 // loop_pre_header
      _
    $region3: #{tpu_custom_call.1} parent=1 // loop_header
      %s13 = sphi 0, %s17
      %p14 = scmp.ge.s32.totalorder %s13, 6
      %s23 = sphi 0, %s25
      %s26 = sphi 0, %s23
      %s27 = sphi 0, %s26
      %s43 = sphi 0, %s27
      %s49 = sphi 0, %s51
      %s52 = sphi 0, %s49
      %s53 = sphi 0, %s52
      %s69 = sphi 0, %s53
    $region4: #{tpu_custom_call.1} parent=1 // loop_header_branch
      %16 = sbr.rel (%p14) target = $region8
    $region5: #{tpu_custom_call.1} parent=1 // loop_body
      %s18 = ssub.s32 %s13, 1
      %s19 = ssub.s32 %s13, 2
      %s20 = sadd.s32 %s13, 1
      %s21 = ssub.s32 %s13, %s20
      %p22 = scmp.eq.s32.totalorder %s21, 0
      %s24 = sadd.s32 %s23, 1
      %s25 = scalar_select %p22, %s23, %s24
      %p28 = pneg %p22
      %p29 = scmp.eq.s32.totalorder %s13, 3
      %p30 = por %p28, %p29
      %p31 = scmp.ne.s32.totalorder %s23, %s26
      %p32 = scmp.eq.s32.totalorder %s13, 0
      %p33 = por %p31, %p32
      %p34 = scmp.ne.s32.totalorder %s23, %s26
      %p35 = scmp.eq.s32.totalorder %s18, 3
      %p36 = por %p34, %p35
      %p37 = scmp.ne.s32.totalorder %s26, %s27
      %p38 = scmp.eq.s32.totalorder %s18, 0
      %p39 = por %p37, %p38
      %p40 = scmp.ne.s32.totalorder %s26, %s27
      %p41 = scmp.eq.s32.totalorder %s19, 3
      %p42 = por %p40, %p41
      %p44 = scmp.ne.s32.totalorder %s27, %s43
      %p45 = scmp.eq.s32.totalorder %s19, 0
      %p46 = por %p44, %p45
      %s47 = ssub.s32 %s13, %s20
      %p48 = scmp.eq.s32.totalorder %s47, 0
      %s50 = sadd.s32 %s49, 1
      %s51 = scalar_select %p48, %s49, %s50
      %p54 = pneg %p48
      %p55 = scmp.eq.s32.totalorder %s13, 3
      %p56 = por %p54, %p55
      %p57 = scmp.ne.s32.totalorder %s49, %s52
      %p58 = scmp.eq.s32.totalorder %s13, 0
      %p59 = por %p57, %p58
      %p60 = scmp.ne.s32.totalorder %s49, %s52
      %p61 = scmp.eq.s32.totalorder %s18, 3
      %p62 = por %p60, %p61
      %p63 = scmp.ne.s32.totalorder %s52, %s53
      %p64 = scmp.eq.s32.totalorder %s18, 0
      %p65 = por %p63, %p64
      %p66 = scmp.ne.s32.totalorder %s52, %s53
      %p67 = scmp.eq.s32.totalorder %s19, 3
      %p68 = por %p66, %p67
      %p70 = scmp.ne.s32.totalorder %s53, %s69
      %p71 = scmp.eq.s32.totalorder %s19, 0
      %p72 = por %p70, %p71
      %p73 = scmp.le.s32.totalorder 1, %s13
      %p74 = scmp.lt.s32.totalorder %s13, 5
      %p75 = pnand %p73, %p74
      %p76 = pneg %p75
      // Predicated region
      $region9: #{tpu_custom_call.1} parent=5 // pred_check
        _
      $region10: #{tpu_custom_call.1} parent=5 // pred_check_branch
        %78 = sbr.rel (%p75) target = $region12
      $region11: #{tpu_custom_call.1} parent=5 // pred_region
        %s79 = ssub.s32 %s13, 1
      $region12: #{tpu_custom_call.1} parent=5 // pred_fallthru
        _
      %p80 = scmp.lt.s32.totalorder %s13, 4
      // Predicated region
      $region13: #{tpu_custom_call.1} parent=5 // pred_check
        %p81 = pneg %p80
      $region14: #{tpu_custom_call.1} parent=5 // pred_check_branch
        %83 = sbr.rel (%p81) target = $region16
      $region15: #{tpu_custom_call.1} parent=5 // pred_region
        // Predicated region
        $region17: #{tpu_custom_call.1} parent=15 // pred_check
          %p84 = pneg %p33
        $region18: #{tpu_custom_call.1} parent=15 // pred_check_branch
          %86 = sbr.rel (%p84) target = $region20
        $region19: #{tpu_custom_call.1} parent=15 // pred_region
          %s87 = sand.u32 %s23, 1
          %s88 = scalar_lea.sflag [#allocation3], %s87
          %s89 = sand.u32 %s23, 1
          %s90 = smul.addr %s89, 1024
          %s91 = scalar_lea.vmem [#allocation2], %s90
          %s92 = smul.u32 8, %s13
          %s94 = ssub.s32 16384, 16384
          %95 = vsyncadd %s88, %s94
          %s96 = smul.addr %s92, 16
          %s97 = smul.addr %s96, 128
          %s98 = scalar_lea.hbm %s0, %s97
          %s99 = sshll.u32 %s91, 4
          %s100 = int_to_ptr.vmem [resolvable:$true] %s99
          %105 = dma.hbm_to_vmem [thread:$0]  %s98, 16384, %s100, %s88, 2048, 2048, 128
        $region20: #{tpu_custom_call.1} parent=15 // pred_fallthru
          _
      $region16: #{tpu_custom_call.1} parent=5 // pred_fallthru
        _
      %p106 = scmp.le.s32.totalorder 1, %s13
      %p107 = scmp.lt.s32.totalorder %s13, 5
      %p108 = pnand %p106, %p107
      %p109 = pneg %p108
      // Predicated region
      $region21: #{tpu_custom_call.1} parent=5 // pred_check
        _
      $region22: #{tpu_custom_call.1} parent=5 // pred_check_branch
        %111 = sbr.rel (%p108) target = $region24
      $region23: #{tpu_custom_call.1} parent=5 // pred_region
        %s112 = ssub.s32 %s13, 1
        %s113 = sand.u32 %s26, 1
        %s114 = scalar_lea.sflag [#allocation3], %s113
        %s115 = sand.u32 %s26, 1
        %s116 = smul.addr %s115, 1024
        %s117 = scalar_lea.vmem [#allocation2], %s116
        // Predicated region
        $region25: #{tpu_custom_call.1} parent=23 // pred_check
          %p118 = pneg %p39
        $region26: #{tpu_custom_call.1} parent=23 // pred_check_branch
          %120 = sbr.rel (%p118) target = $region28
        $region27: #{tpu_custom_call.1} parent=23 // pred_region
          %121 = dma.done %s114, 16384
        $region28: #{tpu_custom_call.1} parent=23 // pred_fallthru
          _
        %s122 = sand.u32 %s26, 1
        %s123 = scalar_lea.sflag [#allocation3], %s122
        %s124 = sand.u32 %s26, 1
        %s125 = smul.addr %s124, 1024
        %s126 = scalar_lea.vmem [#allocation2], %s125
        %p127 = pneg %p39
        %p128 = pneg %p36
        %p129 = pneg %p65
        %p130 = pneg %p62
        %s131 = sand.u32 %s52, 1
        %s132 = scalar_lea.sflag [#allocation4], %s131
        %s133 = sand.u32 %s52, 1
        %s134 = smul.addr %s133, 1024
        %s135 = scalar_lea.vmem [#allocation5], %s134
        %s136 = smul.u32 8, %s18
        %s137 = smul.u32 8, %s18
        %v138 = vld [vmem:[%s117] sm:$0xff]
        %v139 = vld [vmem:[%s117 + $0x8] sm:$0xff]
        %v140 = vld [vmem:[%s117 + $0x10] sm:$0xff]
        %v141 = vld [vmem:[%s117 + $0x18] sm:$0xff]
        %v142 = vld [vmem:[%s117 + $0x20] sm:$0xff]
        %v143 = vld [vmem:[%s117 + $0x28] sm:$0xff]
        %v144 = vld [vmem:[%s117 + $0x30] sm:$0xff]
        %v145 = vld [vmem:[%s117 + $0x38] sm:$0xff]
        %v146 = vld [vmem:[%s117 + $0x40] sm:$0xff]
        %v147 = vld [vmem:[%s117 + $0x48] sm:$0xff]
        %v148 = vld [vmem:[%s117 + $0x50] sm:$0xff]
        %v149 = vld [vmem:[%s117 + $0x58] sm:$0xff]
        %v150 = vld [vmem:[%s117 + $0x60] sm:$0xff]
        %v151 = vld [vmem:[%s117 + $0x68] sm:$0xff]
        %v152 = vld [vmem:[%s117 + $0x70] sm:$0xff]
        %v153 = vld [vmem:[%s117 + $0x78] sm:$0xff]
        %v154 = vld [vmem:[%s117 + $0x80] sm:$0xff]
        %v155 = vld [vmem:[%s117 + $0x88] sm:$0xff]
        %v156 = vld [vmem:[%s117 + $0x90] sm:$0xff]
        %v157 = vld [vmem:[%s117 + $0x98] sm:$0xff]
        %v158 = vld [vmem:[%s117 + $0xa0] sm:$0xff]
        %v159 = vld [vmem:[%s117 + $0xa8] sm:$0xff]
        %v160 = vld [vmem:[%s117 + $0xb0] sm:$0xff]
        %v161 = vld [vmem:[%s117 + $0xb8] sm:$0xff]
        %v162 = vld [vmem:[%s117 + $0xc0] sm:$0xff]
        %v163 = vld [vmem:[%s117 + $0xc8] sm:$0xff]
        %v164 = vld [vmem:[%s117 + $0xd0] sm:$0xff]
        %v165 = vld [vmem:[%s117 + $0xd8] sm:$0xff]
        %v166 = vld [vmem:[%s117 + $0xe0] sm:$0xff]
        %v167 = vld [vmem:[%s117 + $0xe8] sm:$0xff]
        %v168 = vld [vmem:[%s117 + $0xf0] sm:$0xff]
        %v169 = vld [vmem:[%s117 + $0xf8] sm:$0xff]
        %v170 = vld [vmem:[%s117 + $0x100] sm:$0xff]
        %v171 = vld [vmem:[%s117 + $0x108] sm:$0xff]
        %v172 = vld [vmem:[%s117 + $0x110] sm:$0xff]
        %v173 = vld [vmem:[%s117 + $0x118] sm:$0xff]
        %v174 = vld [vmem:[%s117 + $0x120] sm:$0xff]
        %v175 = vld [vmem:[%s117 + $0x128] sm:$0xff]
        %v176 = vld [vmem:[%s117 + $0x130] sm:$0xff]
        %v177 = vld [vmem:[%s117 + $0x138] sm:$0xff]
        %v178 = vld [vmem:[%s117 + $0x140] sm:$0xff]
        %v179 = vld [vmem:[%s117 + $0x148] sm:$0xff]
        %v180 = vld [vmem:[%s117 + $0x150] sm:$0xff]
        %v181 = vld [vmem:[%s117 + $0x158] sm:$0xff]
        %v182 = vld [vmem:[%s117 + $0x160] sm:$0xff]
        %v183 = vld [vmem:[%s117 + $0x168] sm:$0xff]
        %v184 = vld [vmem:[%s117 + $0x170] sm:$0xff]
        %v185 = vld [vmem:[%s117 + $0x178] sm:$0xff]
        %v186 = vld [vmem:[%s117 + $0x180] sm:$0xff]
        %v187 = vld [vmem:[%s117 + $0x188] sm:$0xff]
        %v188 = vld [vmem:[%s117 + $0x190] sm:$0xff]
        %v189 = vld [vmem:[%s117 + $0x198] sm:$0xff]
        %v190 = vld [vmem:[%s117 + $0x1a0] sm:$0xff]
        %v191 = vld [vmem:[%s117 + $0x1a8] sm:$0xff]
        %v192 = vld [vmem:[%s117 + $0x1b0] sm:$0xff]
        %v193 = vld [vmem:[%s117 + $0x1b8] sm:$0xff]
        %v194 = vld [vmem:[%s117 + $0x1c0] sm:$0xff]
        %v195 = vld [vmem:[%s117 + $0x1c8] sm:$0xff]
        %v196 = vld [vmem:[%s117 + $0x1d0] sm:$0xff]
        %v197 = vld [vmem:[%s117 + $0x1d8] sm:$0xff]
        %v198 = vld [vmem:[%s117 + $0x1e0] sm:$0xff]
        %v199 = vld [vmem:[%s117 + $0x1e8] sm:$0xff]
        %v200 = vld [vmem:[%s117 + $0x1f0] sm:$0xff]
        %v201 = vld [vmem:[%s117 + $0x1f8] sm:$0xff]
        %v202 = vld [vmem:[%s117 + $0x200] sm:$0xff]
        %v203 = vld [vmem:[%s117 + $0x208] sm:$0xff]
        %v204 = vld [vmem:[%s117 + $0x210] sm:$0xff]
        %v205 = vld [vmem:[%s117 + $0x218] sm:$0xff]
        %v206 = vld [vmem:[%s117 + $0x220] sm:$0xff]
        %v207 = vld [vmem:[%s117 + $0x228] sm:$0xff]
        %v208 = vld [vmem:[%s117 + $0x230] sm:$0xff]
        %v209 = vld [vmem:[%s117 + $0x238] sm:$0xff]
        %v210 = vld [vmem:[%s117 + $0x240] sm:$0xff]
        %v211 = vld [vmem:[%s117 + $0x248] sm:$0xff]
        %v212 = vld [vmem:[%s117 + $0x250] sm:$0xff]
        %v213 = vld [vmem:[%s117 + $0x258] sm:$0xff]
        %v214 = vld [vmem:[%s117 + $0x260] sm:$0xff]
        %v215 = vld [vmem:[%s117 + $0x268] sm:$0xff]
        %v216 = vld [vmem:[%s117 + $0x270] sm:$0xff]
        %v217 = vld [vmem:[%s117 + $0x278] sm:$0xff]
        %v218 = vld [vmem:[%s117 + $0x280] sm:$0xff]
        %v219 = vld [vmem:[%s117 + $0x288] sm:$0xff]
        %v220 = vld [vmem:[%s117 + $0x290] sm:$0xff]
        %v221 = vld [vmem:[%s117 + $0x298] sm:$0xff]
        %v222 = vld [vmem:[%s117 + $0x2a0] sm:$0xff]
        %v223 = vld [vmem:[%s117 + $0x2a8] sm:$0xff]
        %v224 = vld [vmem:[%s117 + $0x2b0] sm:$0xff]
        %v225 = vld [vmem:[%s117 + $0x2b8] sm:$0xff]
        %v226 = vld [vmem:[%s117 + $0x2c0] sm:$0xff]
        %v227 = vld [vmem:[%s117 + $0x2c8] sm:$0xff]
        %v228 = vld [vmem:[%s117 + $0x2d0] sm:$0xff]
        %v229 = vld [vmem:[%s117 + $0x2d8] sm:$0xff]
        %v230 = vld [vmem:[%s117 + $0x2e0] sm:$0xff]
        %v231 = vld [vmem:[%s117 + $0x2e8] sm:$0xff]
        %v232 = vld [vmem:[%s117 + $0x2f0] sm:$0xff]
        %v233 = vld [vmem:[%s117 + $0x2f8] sm:$0xff]
        %v234 = vld [vmem:[%s117 + $0x300] sm:$0xff]
        %v235 = vld [vmem:[%s117 + $0x308] sm:$0xff]
        %v236 = vld [vmem:[%s117 + $0x310] sm:$0xff]
        %v237 = vld [vmem:[%s117 + $0x318] sm:$0xff]
        %v238 = vld [vmem:[%s117 + $0x320] sm:$0xff]
        %v239 = vld [vmem:[%s117 + $0x328] sm:$0xff]
        %v240 = vld [vmem:[%s117 + $0x330] sm:$0xff]
        %v241 = vld [vmem:[%s117 + $0x338] sm:$0xff]
        %v242 = vld [vmem:[%s117 + $0x340] sm:$0xff]
        %v243 = vld [vmem:[%s117 + $0x348] sm:$0xff]
        %v244 = vld [vmem:[%s117 + $0x350] sm:$0xff]
        %v245 = vld [vmem:[%s117 + $0x358] sm:$0xff]
        %v246 = vld [vmem:[%s117 + $0x360] sm:$0xff]
        %v247 = vld [vmem:[%s117 + $0x368] sm:$0xff]
        %v248 = vld [vmem:[%s117 + $0x370] sm:$0xff]
        %v249 = vld [vmem:[%s117 + $0x378] sm:$0xff]
        %v250 = vld [vmem:[%s117 + $0x380] sm:$0xff]
        %v251 = vld [vmem:[%s117 + $0x388] sm:$0xff]
        %v252 = vld [vmem:[%s117 + $0x390] sm:$0xff]
        %v253 = vld [vmem:[%s117 + $0x398] sm:$0xff]
        %v254 = vld [vmem:[%s117 + $0x3a0] sm:$0xff]
        %v255 = vld [vmem:[%s117 + $0x3a8] sm:$0xff]
        %v256 = vld [vmem:[%s117 + $0x3b0] sm:$0xff]
        %v257 = vld [vmem:[%s117 + $0x3b8] sm:$0xff]
        %v258 = vld [vmem:[%s117 + $0x3c0] sm:$0xff]
        %v259 = vld [vmem:[%s117 + $0x3c8] sm:$0xff]
        %v260 = vld [vmem:[%s117 + $0x3d0] sm:$0xff]
        %v261 = vld [vmem:[%s117 + $0x3d8] sm:$0xff]
        %v262 = vld [vmem:[%s117 + $0x3e0] sm:$0xff]
        %v263 = vld [vmem:[%s117 + $0x3e8] sm:$0xff]
        %v264 = vld [vmem:[%s117 + $0x3f0] sm:$0xff]
        %v265 = vld [vmem:[%s117 + $0x3f8] sm:$0xff]
        %v266 = vmul.f32 %v138, 1.442695
        %v267 = vpow.pop %v266
        %v268 = vmul.f32 %v139, 1.442695
        %v269 = vpow.pop %v268
        %v270 = vmul.f32 %v140, 1.442695
        %v271 = vpow.pop %v270
        %v272 = vmul.f32 %v141, 1.442695
        %v273 = vpow.pop %v272
        %v274 = vmul.f32 %v142, 1.442695
        %v275 = vpow.pop %v274
        %v276 = vmul.f32 %v143, 1.442695
        %v277 = vpow.pop %v276
        %v278 = vmul.f32 %v144, 1.442695
        %v279 = vpow.pop %v278
        %v280 = vmul.f32 %v145, 1.442695
        %v281 = vpow.pop %v280
        %v282 = vmul.f32 %v146, 1.442695
        %v283 = vpow.pop %v282
        %v284 = vmul.f32 %v147, 1.442695
        %v285 = vpow.pop %v284
        %v286 = vmul.f32 %v148, 1.442695
        %v287 = vpow.pop %v286
        %v288 = vmul.f32 %v149, 1.442695
        %v289 = vpow.pop %v288
        %v290 = vmul.f32 %v150, 1.442695
        %v291 = vpow.pop %v290
        %v292 = vmul.f32 %v151, 1.442695
        %v293 = vpow.pop %v292
        %v294 = vmul.f32 %v152, 1.442695
        %v295 = vpow.pop %v294
        %v296 = vmul.f32 %v153, 1.442695
        %v297 = vpow.pop %v296
        %v298 = vmul.f32 %v154, 1.442695
        %v299 = vpow.pop %v298
        %v300 = vmul.f32 %v155, 1.442695
        %v301 = vpow.pop %v300
        %v302 = vmul.f32 %v156, 1.442695
        %v303 = vpow.pop %v302
        %v304 = vmul.f32 %v157, 1.442695
        %v305 = vpow.pop %v304
        %v306 = vmul.f32 %v158, 1.442695
        %v307 = vpow.pop %v306
        %v308 = vmul.f32 %v159, 1.442695
        %v309 = vpow.pop %v308
        %v310 = vmul.f32 %v160, 1.442695
        %v311 = vpow.pop %v310
        %v312 = vmul.f32 %v161, 1.442695
        %v313 = vpow.pop %v312
        %v314 = vmul.f32 %v162, 1.442695
        %v315 = vpow.pop %v314
        %v316 = vmul.f32 %v163, 1.442695
        %v317 = vpow.pop %v316
        %v318 = vmul.f32 %v164, 1.442695
        %v319 = vpow.pop %v318
        %v320 = vmul.f32 %v165, 1.442695
        %v321 = vpow.pop %v320
        %v322 = vmul.f32 %v166, 1.442695
        %v323 = vpow.pop %v322
        %v324 = vmul.f32 %v167, 1.442695
        %v325 = vpow.pop %v324
        %v326 = vmul.f32 %v168, 1.442695
        %v327 = vpow.pop %v326
        %v328 = vmul.f32 %v169, 1.442695
        %v329 = vpow.pop %v328
        %v330 = vmul.f32 %v170, 1.442695
        %v331 = vpow.pop %v330
        %v332 = vmul.f32 %v171, 1.442695
        %v333 = vpow.pop %v332
        %v334 = vmul.f32 %v172, 1.442695
        %v335 = vpow.pop %v334
        %v336 = vmul.f32 %v173, 1.442695
        %v337 = vpow.pop %v336
        %v338 = vmul.f32 %v174, 1.442695
        %v339 = vpow.pop %v338
        %v340 = vmul.f32 %v175, 1.442695
        %v341 = vpow.pop %v340
        %v342 = vmul.f32 %v176, 1.442695
        %v343 = vpow.pop %v342
        %v344 = vmul.f32 %v177, 1.442695
        %v345 = vpow.pop %v344
        %v346 = vmul.f32 %v178, 1.442695
        %v347 = vpow.pop %v346
        %v348 = vmul.f32 %v179, 1.442695
        %v349 = vpow.pop %v348
        %v350 = vmul.f32 %v180, 1.442695
        %v351 = vpow.pop %v350
        %v352 = vmul.f32 %v181, 1.442695
        %v353 = vpow.pop %v352
        %v354 = vmul.f32 %v182, 1.442695
        %v355 = vpow.pop %v354
        %v356 = vmul.f32 %v183, 1.442695
        %v357 = vpow.pop %v356
        %v358 = vmul.f32 %v184, 1.442695
        %v359 = vpow.pop %v358
        %v360 = vmul.f32 %v185, 1.442695
        %v361 = vpow.pop %v360
        %v362 = vmul.f32 %v186, 1.442695
        %v363 = vpow.pop %v362
        %v364 = vmul.f32 %v187, 1.442695
        %v365 = vpow.pop %v364
        %v366 = vmul.f32 %v188, 1.442695
        %v367 = vpow.pop %v366
        %v368 = vmul.f32 %v189, 1.442695
        %v369 = vpow.pop %v368
        %v370 = vmul.f32 %v190, 1.442695
        %v371 = vpow.pop %v370
        %v372 = vmul.f32 %v191, 1.442695
        %v373 = vpow.pop %v372
        %v374 = vmul.f32 %v192, 1.442695
        %v375 = vpow.pop %v374
        %v376 = vmul.f32 %v193, 1.442695
        %v377 = vpow.pop %v376
        %v378 = vmul.f32 %v194, 1.442695
        %v379 = vpow.pop %v378
        %v380 = vmul.f32 %v195, 1.442695
        %v381 = vpow.pop %v380
        %v382 = vmul.f32 %v196, 1.442695
        %v383 = vpow.pop %v382
        %v384 = vmul.f32 %v197, 1.442695
        %v385 = vpow.pop %v384
        %v386 = vmul.f32 %v198, 1.442695
        %v387 = vpow.pop %v386
        %v388 = vmul.f32 %v199, 1.442695
        %v389 = vpow.pop %v388
        %v390 = vmul.f32 %v200, 1.442695
        %v391 = vpow.pop %v390
        %v392 = vmul.f32 %v201, 1.442695
        %v393 = vpow.pop %v392
        %v394 = vmul.f32 %v202, 1.442695
        %v395 = vpow.pop %v394
        %v396 = vmul.f32 %v203, 1.442695
        %v397 = vpow.pop %v396
        %v398 = vmul.f32 %v204, 1.442695
        %v399 = vpow.pop %v398
        %v400 = vmul.f32 %v205, 1.442695
        %v401 = vpow.pop %v400
        %v402 = vmul.f32 %v206, 1.442695
        %v403 = vpow.pop %v402
        %v404 = vmul.f32 %v207, 1.442695
        %v405 = vpow.pop %v404
        %v406 = vmul.f32 %v208, 1.442695
        %v407 = vpow.pop %v406
        %v408 = vmul.f32 %v209, 1.442695
        %v409 = vpow.pop %v408
        %v410 = vmul.f32 %v210, 1.442695
        %v411 = vpow.pop %v410
        %v412 = vmul.f32 %v211, 1.442695
        %v413 = vpow.pop %v412
        %v414 = vmul.f32 %v212, 1.442695
        %v415 = vpow.pop %v414
        %v416 = vmul.f32 %v213, 1.442695
        %v417 = vpow.pop %v416
        %v418 = vmul.f32 %v214, 1.442695
        %v419 = vpow.pop %v418
        %v420 = vmul.f32 %v215, 1.442695
        %v421 = vpow.pop %v420
        %v422 = vmul.f32 %v216, 1.442695
        %v423 = vpow.pop %v422
        %v424 = vmul.f32 %v217, 1.442695
        %v425 = vpow.pop %v424
        %v426 = vmul.f32 %v218, 1.442695
        %v427 = vpow.pop %v426
        %v428 = vmul.f32 %v219, 1.442695
        %v429 = vpow.pop %v428
        %v430 = vmul.f32 %v220, 1.442695
        %v431 = vpow.pop %v430
        %v432 = vmul.f32 %v221, 1.442695
        %v433 = vpow.pop %v432
        %v434 = vmul.f32 %v222, 1.442695
        %v435 = vpow.pop %v434
        %v436 = vmul.f32 %v223, 1.442695
        %v437 = vpow.pop %v436
        %v438 = vmul.f32 %v224, 1.442695
        %v439 = vpow.pop %v438
        %v440 = vmul.f32 %v225, 1.442695
        %v441 = vpow.pop %v440
        %v442 = vmul.f32 %v226, 1.442695
        %v443 = vpow.pop %v442
        %v444 = vmul.f32 %v227, 1.442695
        %v445 = vpow.pop %v444
        %v446 = vmul.f32 %v228, 1.442695
        %v447 = vpow.pop %v446
        %v448 = vmul.f32 %v229, 1.442695
        %v449 = vpow.pop %v448
        %v450 = vmul.f32 %v230, 1.442695
        %v451 = vpow.pop %v450
        %v452 = vmul.f32 %v231, 1.442695
        %v453 = vpow.pop %v452
        %v454 = vmul.f32 %v232, 1.442695
        %v455 = vpow.pop %v454
        %v456 = vmul.f32 %v233, 1.442695
        %v457 = vpow.pop %v456
        %v458 = vmul.f32 %v234, 1.442695
        %v459 = vpow.pop %v458
        %v460 = vmul.f32 %v235, 1.442695
        %v461 = vpow.pop %v460
        %v462 = vmul.f32 %v236, 1.442695
        %v463 = vpow.pop %v462
        %v464 = vmul.f32 %v237, 1.442695
        %v465 = vpow.pop %v464
        %v466 = vmul.f32 %v238, 1.442695
        %v467 = vpow.pop %v466
        %v468 = vmul.f32 %v239, 1.442695
        %v469 = vpow.pop %v468
        %v470 = vmul.f32 %v240, 1.442695
        %v471 = vpow.pop %v470
        %v472 = vmul.f32 %v241, 1.442695
        %v473 = vpow.pop %v472
        %v474 = vmul.f32 %v242, 1.442695
        %v475 = vpow.pop %v474
        %v476 = vmul.f32 %v243, 1.442695
        %v477 = vpow.pop %v476
        %v478 = vmul.f32 %v244, 1.442695
        %v479 = vpow.pop %v478
        %v480 = vmul.f32 %v245, 1.442695
        %v481 = vpow.pop %v480
        %v482 = vmul.f32 %v246, 1.442695
        %v483 = vpow.pop %v482
        %v484 = vmul.f32 %v247, 1.442695
        %v485 = vpow.pop %v484
        %v486 = vmul.f32 %v248, 1.442695
        %v487 = vpow.pop %v486
        %v488 = vmul.f32 %v249, 1.442695
        %v489 = vpow.pop %v488
        %v490 = vmul.f32 %v250, 1.442695
        %v491 = vpow.pop %v490
        %v492 = vmul.f32 %v251, 1.442695
        %v493 = vpow.pop %v492
        %v494 = vmul.f32 %v252, 1.442695
        %v495 = vpow.pop %v494
        %v496 = vmul.f32 %v253, 1.442695
        %v497 = vpow.pop %v496
        %v498 = vmul.f32 %v254, 1.442695
        %v499 = vpow.pop %v498
        %v500 = vmul.f32 %v255, 1.442695
        %v501 = vpow.pop %v500
        %v502 = vmul.f32 %v256, 1.442695
        %v503 = vpow.pop %v502
        %v504 = vmul.f32 %v257, 1.442695
        %v505 = vpow.pop %v504
        %v506 = vmul.f32 %v258, 1.442695
        %v507 = vpow.pop %v506
        %v508 = vmul.f32 %v259, 1.442695
        %v509 = vpow.pop %v508
        %v510 = vmul.f32 %v260, 1.442695
        %v511 = vpow.pop %v510
        %v512 = vmul.f32 %v261, 1.442695
        %v513 = vpow.pop %v512
        %v514 = vmul.f32 %v262, 1.442695
        %v515 = vpow.pop %v514
        %v516 = vmul.f32 %v263, 1.442695
        %v517 = vpow.pop %v516
        %v518 = vmul.f32 %v264, 1.442695
        %v519 = vpow.pop %v518
        %v520 = vmul.f32 %v265, 1.442695
        %v521 = vpow.pop %v520
        %522 = vst [vmem:[%s135] sm:$0xff] %v267
        %523 = vst [vmem:[%s135 + $0x8] sm:$0xff] %v269
        %524 = vst [vmem:[%s135 + $0x10] sm:$0xff] %v271
        %525 = vst [vmem:[%s135 + $0x18] sm:$0xff] %v273
        %526 = vst [vmem:[%s135 + $0x20] sm:$0xff] %v275
        %527 = vst [vmem:[%s135 + $0x28] sm:$0xff] %v277
        %528 = vst [vmem:[%s135 + $0x30] sm:$0xff] %v279
        %529 = vst [vmem:[%s135 + $0x38] sm:$0xff] %v281
        %530 = vst [vmem:[%s135 + $0x40] sm:$0xff] %v283
        %531 = vst [vmem:[%s135 + $0x48] sm:$0xff] %v285
        %532 = vst [vmem:[%s135 + $0x50] sm:$0xff] %v287
        %533 = vst [vmem:[%s135 + $0x58] sm:$0xff] %v289
        %534 = vst [vmem:[%s135 + $0x60] sm:$0xff] %v291
        %535 = vst [vmem:[%s135 + $0x68] sm:$0xff] %v293
        %536 = vst [vmem:[%s135 + $0x70] sm:$0xff] %v295
        %537 = vst [vmem:[%s135 + $0x78] sm:$0xff] %v297
        %538 = vst [vmem:[%s135 + $0x80] sm:$0xff] %v299
        %539 = vst [vmem:[%s135 + $0x88] sm:$0xff] %v301
        %540 = vst [vmem:[%s135 + $0x90] sm:$0xff] %v303
        %541 = vst [vmem:[%s135 + $0x98] sm:$0xff] %v305
        %542 = vst [vmem:[%s135 + $0xa0] sm:$0xff] %v307
        %543 = vst [vmem:[%s135 + $0xa8] sm:$0xff] %v309
        %544 = vst [vmem:[%s135 + $0xb0] sm:$0xff] %v311
        %545 = vst [vmem:[%s135 + $0xb8] sm:$0xff] %v313
        %546 = vst [vmem:[%s135 + $0xc0] sm:$0xff] %v315
        %547 = vst [vmem:[%s135 + $0xc8] sm:$0xff] %v317
        %548 = vst [vmem:[%s135 + $0xd0] sm:$0xff] %v319
        %549 = vst [vmem:[%s135 + $0xd8] sm:$0xff] %v321
        %550 = vst [vmem:[%s135 + $0xe0] sm:$0xff] %v323
        %551 = vst [vmem:[%s135 + $0xe8] sm:$0xff] %v325
        %552 = vst [vmem:[%s135 + $0xf0] sm:$0xff] %v327
        %553 = vst [vmem:[%s135 + $0xf8] sm:$0xff] %v329
        %554 = vst [vmem:[%s135 + $0x100] sm:$0xff] %v331
        %555 = vst [vmem:[%s135 + $0x108] sm:$0xff] %v333
        %556 = vst [vmem:[%s135 + $0x110] sm:$0xff] %v335
        %557 = vst [vmem:[%s135 + $0x118] sm:$0xff] %v337
        %558 = vst [vmem:[%s135 + $0x120] sm:$0xff] %v339
        %559 = vst [vmem:[%s135 + $0x128] sm:$0xff] %v341
        %560 = vst [vmem:[%s135 + $0x130] sm:$0xff] %v343
        %561 = vst [vmem:[%s135 + $0x138] sm:$0xff] %v345
        %562 = vst [vmem:[%s135 + $0x140] sm:$0xff] %v347
        %563 = vst [vmem:[%s135 + $0x148] sm:$0xff] %v349
        %564 = vst [vmem:[%s135 + $0x150] sm:$0xff] %v351
        %565 = vst [vmem:[%s135 + $0x158] sm:$0xff] %v353
        %566 = vst [vmem:[%s135 + $0x160] sm:$0xff] %v355
        %567 = vst [vmem:[%s135 + $0x168] sm:$0xff] %v357
        %568 = vst [vmem:[%s135 + $0x170] sm:$0xff] %v359
        %569 = vst [vmem:[%s135 + $0x178] sm:$0xff] %v361
        %570 = vst [vmem:[%s135 + $0x180] sm:$0xff] %v363
        %571 = vst [vmem:[%s135 + $0x188] sm:$0xff] %v365
        %572 = vst [vmem:[%s135 + $0x190] sm:$0xff] %v367
        %573 = vst [vmem:[%s135 + $0x198] sm:$0xff] %v369
        %574 = vst [vmem:[%s135 + $0x1a0] sm:$0xff] %v371
        %575 = vst [vmem:[%s135 + $0x1a8] sm:$0xff] %v373
        %576 = vst [vmem:[%s135 + $0x1b0] sm:$0xff] %v375
        %577 = vst [vmem:[%s135 + $0x1b8] sm:$0xff] %v377
        %578 = vst [vmem:[%s135 + $0x1c0] sm:$0xff] %v379
        %579 = vst [vmem:[%s135 + $0x1c8] sm:$0xff] %v381
        %580 = vst [vmem:[%s135 + $0x1d0] sm:$0xff] %v383
        %581 = vst [vmem:[%s135 + $0x1d8] sm:$0xff] %v385
        %582 = vst [vmem:[%s135 + $0x1e0] sm:$0xff] %v387
        %583 = vst [vmem:[%s135 + $0x1e8] sm:$0xff] %v389
        %584 = vst [vmem:[%s135 + $0x1f0] sm:$0xff] %v391
        %585 = vst [vmem:[%s135 + $0x1f8] sm:$0xff] %v393
        %586 = vst [vmem:[%s135 + $0x200] sm:$0xff] %v395
        %587 = vst [vmem:[%s135 + $0x208] sm:$0xff] %v397
        %588 = vst [vmem:[%s135 + $0x210] sm:$0xff] %v399
        %589 = vst [vmem:[%s135 + $0x218] sm:$0xff] %v401
        %590 = vst [vmem:[%s135 + $0x220] sm:$0xff] %v403
        %591 = vst [vmem:[%s135 + $0x228] sm:$0xff] %v405
        %592 = vst [vmem:[%s135 + $0x230] sm:$0xff] %v407
        %593 = vst [vmem:[%s135 + $0x238] sm:$0xff] %v409
        %594 = vst [vmem:[%s135 + $0x240] sm:$0xff] %v411
        %595 = vst [vmem:[%s135 + $0x248] sm:$0xff] %v413
        %596 = vst [vmem:[%s135 + $0x250] sm:$0xff] %v415
        %597 = vst [vmem:[%s135 + $0x258] sm:$0xff] %v417
        %598 = vst [vmem:[%s135 + $0x260] sm:$0xff] %v419
        %599 = vst [vmem:[%s135 + $0x268] sm:$0xff] %v421
        %600 = vst [vmem:[%s135 + $0x270] sm:$0xff] %v423
        %601 = vst [vmem:[%s135 + $0x278] sm:$0xff] %v425
        %602 = vst [vmem:[%s135 + $0x280] sm:$0xff] %v427
        %603 = vst [vmem:[%s135 + $0x288] sm:$0xff] %v429
        %604 = vst [vmem:[%s135 + $0x290] sm:$0xff] %v431
        %605 = vst [vmem:[%s135 + $0x298] sm:$0xff] %v433
        %606 = vst [vmem:[%s135 + $0x2a0] sm:$0xff] %v435
        %607 = vst [vmem:[%s135 + $0x2a8] sm:$0xff] %v437
        %608 = vst [vmem:[%s135 + $0x2b0] sm:$0xff] %v439
        %609 = vst [vmem:[%s135 + $0x2b8] sm:$0xff] %v441
        %610 = vst [vmem:[%s135 + $0x2c0] sm:$0xff] %v443
        %611 = vst [vmem:[%s135 + $0x2c8] sm:$0xff] %v445
        %612 = vst [vmem:[%s135 + $0x2d0] sm:$0xff] %v447
        %613 = vst [vmem:[%s135 + $0x2d8] sm:$0xff] %v449
        %614 = vst [vmem:[%s135 + $0x2e0] sm:$0xff] %v451
        %615 = vst [vmem:[%s135 + $0x2e8] sm:$0xff] %v453
        %616 = vst [vmem:[%s135 + $0x2f0] sm:$0xff] %v455
        %617 = vst [vmem:[%s135 + $0x2f8] sm:$0xff] %v457
        %618 = vst [vmem:[%s135 + $0x300] sm:$0xff] %v459
        %619 = vst [vmem:[%s135 + $0x308] sm:$0xff] %v461
        %620 = vst [vmem:[%s135 + $0x310] sm:$0xff] %v463
        %621 = vst [vmem:[%s135 + $0x318] sm:$0xff] %v465
        %622 = vst [vmem:[%s135 + $0x320] sm:$0xff] %v467
        %623 = vst [vmem:[%s135 + $0x328] sm:$0xff] %v469
        %624 = vst [vmem:[%s135 + $0x330] sm:$0xff] %v471
        %625 = vst [vmem:[%s135 + $0x338] sm:$0xff] %v473
        %626 = vst [vmem:[%s135 + $0x340] sm:$0xff] %v475
        %627 = vst [vmem:[%s135 + $0x348] sm:$0xff] %v477
        %628 = vst [vmem:[%s135 + $0x350] sm:$0xff] %v479
        %629 = vst [vmem:[%s135 + $0x358] sm:$0xff] %v481
        %630 = vst [vmem:[%s135 + $0x360] sm:$0xff] %v483
        %631 = vst [vmem:[%s135 + $0x368] sm:$0xff] %v485
        %632 = vst [vmem:[%s135 + $0x370] sm:$0xff] %v487
        %633 = vst [vmem:[%s135 + $0x378] sm:$0xff] %v489
        %634 = vst [vmem:[%s135 + $0x380] sm:$0xff] %v491
        %635 = vst [vmem:[%s135 + $0x388] sm:$0xff] %v493
        %636 = vst [vmem:[%s135 + $0x390] sm:$0xff] %v495
        %637 = vst [vmem:[%s135 + $0x398] sm:$0xff] %v497
        %638 = vst [vmem:[%s135 + $0x3a0] sm:$0xff] %v499
        %639 = vst [vmem:[%s135 + $0x3a8] sm:$0xff] %v501
        %640 = vst [vmem:[%s135 + $0x3b0] sm:$0xff] %v503
        %641 = vst [vmem:[%s135 + $0x3b8] sm:$0xff] %v505
        %642 = vst [vmem:[%s135 + $0x3c0] sm:$0xff] %v507
        %643 = vst [vmem:[%s135 + $0x3c8] sm:$0xff] %v509
        %644 = vst [vmem:[%s135 + $0x3d0] sm:$0xff] %v511
        %645 = vst [vmem:[%s135 + $0x3d8] sm:$0xff] %v513
        %646 = vst [vmem:[%s135 + $0x3e0] sm:$0xff] %v515
        %647 = vst [vmem:[%s135 + $0x3e8] sm:$0xff] %v517
        %648 = vst [vmem:[%s135 + $0x3f0] sm:$0xff] %v519
        %649 = vst [vmem:[%s135 + $0x3f8] sm:$0xff] %v521
        %s650 = sand.u32 %s52, 1
        %s651 = scalar_lea.sflag [#allocation4], %s650
        %s652 = sand.u32 %s52, 1
        %s653 = smul.addr %s652, 1024
        %s654 = scalar_lea.vmem [#allocation5], %s653
        // Predicated region
        $region29: #{tpu_custom_call.1} parent=23 // pred_check
          %p655 = pneg %p62
        $region30: #{tpu_custom_call.1} parent=23 // pred_check_branch
          %657 = sbr.rel (%p655) target = $region32
        $region31: #{tpu_custom_call.1} parent=23 // pred_region
          %s658 = smul.u32 8, %s18
          %s660 = ssub.s32 16384, 16384
          %661 = vsyncadd %s651, %s660
          %s662 = smul.addr %s658, 16
          %s663 = smul.addr %s662, 128
          %s664 = scalar_lea.hbm %s1, %s663
          %s665 = sshll.u32 %s654, 4
          %s666 = int_to_ptr.vmem [resolvable:$true] %s665
          %671 = dma.vmem_to_hbm [thread:$0]  %s666, 16384, %s664, %s651, 2048, 2048, 128
        $region32: #{tpu_custom_call.1} parent=23 // pred_fallthru
          _
      $region24: #{tpu_custom_call.1} parent=5 // pred_fallthru
        _
      %p672 = scmp.le.s32.totalorder 2, %s13
      // Predicated region
      $region33: #{tpu_custom_call.1} parent=5 // pred_check
        %p673 = pneg %p672
      $region34: #{tpu_custom_call.1} parent=5 // pred_check_branch
        %675 = sbr.rel (%p673) target = $region36
      $region35: #{tpu_custom_call.1} parent=5 // pred_region
        %s676 = ssub.s32 %s13, 2
        // Predicated region
        $region37: #{tpu_custom_call.1} parent=35 // pred_check
          %p677 = pneg %p68
        $region38: #{tpu_custom_call.1} parent=35 // pred_check_branch
          %679 = sbr.rel (%p677) target = $region40
        $region39: #{tpu_custom_call.1} parent=35 // pred_region
          %s680 = sand.u32 %s53, 1
          %s681 = scalar_lea.sflag [#allocation4], %s680
          %s682 = sand.u32 %s53, 1
          %s683 = smul.addr %s682, 1024
          %s684 = scalar_lea.vmem [#allocation5], %s683
          %685 = dma.done %s681, 16384
        $region40: #{tpu_custom_call.1} parent=35 // pred_fallthru
          _
      $region36: #{tpu_custom_call.1} parent=5 // pred_fallthru
        _
    $region6: #{tpu_custom_call.1} parent=1 // loop_footer
      %s17 = sadd.s32 1, %s13
    $region7: #{tpu_custom_call.1} parent=1 // loop_footer_branch
      %12 = sbr.rel target = $region3
    $region8: #{tpu_custom_call.1} parent=1 // loop_exit
      _
    %686 = vsyncpa [#allocation3], 1
    %s687 = scalar_lea.sflag [#allocation3], 1
    %688 = vsyncpa %s687, 1
    %689 = vsyncpa [#allocation4], 1
    %s690 = scalar_lea.sflag [#allocation4], 1
    %691 = vsyncpa %s690, 1

</llo_original>
